<compile_context>
chip_gen: v6e
topology: v6e:2x2x1
jax: 0.10.0
libtpu: 0.0.40
codegen_flags: <defaults>
</compile_context>

<pallas_src>
import jax
import jax.numpy as jnp
from jax.experimental import pallas as pl
from jax.experimental.pallas import tpu as pltpu

_EPS = 1e-6          # F.pairwise_distance default eps
_CHUNK = 512         # lanes per reduction slab (bounds live f32 temporaries)


def _round_up(x, m):
    return ((x + m - 1) // m) * m


def _row_align(itemsize):
    # Sub-32-bit dtypes pack rows along sublanes: 8 rows for f32, 16 for
    # bf16/f16, 32 for int8/fp8.
    return max(8, 32 // max(1, itemsize))


def _vmem_capacity_bytes():
    try:
        return int(pltpu.get_tpu_info().vmem_capacity_bytes)
    except Exception:
        return 64 * 1024 * 1024  # conservative fallback (v7x per-TC VMEM)


def _pick_block_rows(B, D, itemsize, input_db_budget):
    """Largest aligned batch tile whose double-buffered inputs fit the budget,
    capped so the grid has >=2 steps whenever the batch allows it."""
    align = _row_align(itemsize)
    tb = input_db_budget // (4 * D * itemsize)   # 2 inputs x 2 pipeline bufs
    tb = max(align, (tb // align) * align)
    if B >= 2 * align:
        # At least two grid steps -> v7x shards them across both TensorCores.
        tb = min(tb, _round_up(pl.cdiv(B, 2), align))
    else:
        tb = min(tb, _round_up(B, align))
    return tb


def _dist_kernel(o1_ref, o2_ref, dist_ref):
    TB, D = o1_ref.shape
    d2 = jnp.zeros((TB, 1), jnp.float32)
    # Static chunked reduction over the feature axis: per-slab f32 upcast so
    # live temporaries stay O(TB * _CHUNK) no matter how large D is.
    for c in range(0, D, _CHUNK):
        w = min(_CHUNK, D - c)
        a = o1_ref[:, c:c + w].astype(jnp.float32)
        b = o2_ref[:, c:c + w].astype(jnp.float32)
        diff = a - b + _EPS                                  # torch adds eps to diff
        d2 = d2 + jnp.sum(diff * diff, axis=-1, keepdims=True)
    dist_ref[...] = jnp.sqrt(d2)


def contrastive_loss(output1, output2, label, *, margin_pos=1.0,
                     margin_neg=2.0):
    """Pallas implementation of ContrastiveLoss.forward.

    Returns (loss_scalar, euclidean_distance[B]).
    """
    del margin_pos  # stored by the torch module, unused in forward()
    B, D = output1.shape
    itemsize = max(jnp.dtype(output1.dtype).itemsize,
                   jnp.dtype(output2.dtype).itemsize)

    # Generation-aware budgets (v5e/v6e: 128 MiB VMEM, v7x: 64 MiB).
    vmem_cap = _vmem_capacity_bytes()
    input_db_budget = (vmem_cap * 3) // 8        # ~48 MiB on 128 MiB parts
    vmem_cap_limit = (vmem_cap * 3) // 4         # ~96 MiB / ~48 MiB ceiling

    TB = _pick_block_rows(B, D, itemsize, input_db_budget)
    grid = (pl.cdiv(B, TB),)

    # VMEM ceiling: double-buffered native-dtype inputs + chunk-bounded f32
    # temporaries + small (TB,1) output buffers + headroom.
    needed = (4 * TB * D * itemsize                 # 2 inputs x 2 buffers
              + 4 * TB * min(D, _CHUNK) * 4         # f32 slab temporaries
              + 8 * TB * 4)                         # dist buffers / accumulator
    vmem_limit = int(min(vmem_cap_limit,
                         max(16 * 1024 * 1024, needed + (4 << 20))))

    cost = pl.CostEstimate(
        flops=3 * B * D + 4 * B,
        transcendentals=B,
        bytes_accessed=(output1.size * jnp.dtype(output1.dtype).itemsize
                        + output2.size * jnp.dtype(output2.dtype).itemsize
                        + B * 4),
    )

    dist = pl.pallas_call(
        _dist_kernel,
        grid=grid,
        in_specs=[
            pl.BlockSpec((TB, D), lambda i: (i, 0)),
            pl.BlockSpec((TB, D), lambda i: (i, 0)),
        ],
        out_specs=pl.BlockSpec((TB, 1), lambda i: (i, 0)),
        out_shape=jax.ShapeDtypeStruct((B, 1), jnp.float32),
        compiler_params=pltpu.CompilerParams(
            dimension_semantics=("parallel",),
            vmem_limit_bytes=vmem_limit,
        ),
        cost_estimate=cost,
    )(output1, output2)[:, 0]

    # Trivial per-row loss + mean in the wrapper (B VPU ops), exactly
    # matching torch's formula (dist**2 after the sqrt).
    lbl = label.astype(jnp.float32)
    neg = jnp.maximum(float(margin_neg) - dist, 0.0)
    loss = jnp.mean((1.0 - lbl) * dist * dist + lbl * neg * neg)
    return loss, dist


def _reference(output1, output2, label, margin_neg):
    diff = output1.astype(jnp.float32) - output2.astype(jnp.float32) + _EPS
    dist = jnp.sqrt(jnp.sum(diff * diff, axis=-1))
    loss = jnp.mean((1.0 - label) * dist ** 2 +
                    label * jnp.maximum(margin_neg - dist, 0.0) ** 2)
    return loss, dist


if __name__ == "__main__":
    key = jax.random.PRNGKey(0)
    k1, k2, k3 = jax.random.split(key, 3)

    # B deliberately NOT a multiple of the batch tile so the partial-tile
    # masking path is exercised (grid has 2 steps, last tile is partial).
    B, D = 24, 32
    margin_pos, margin_neg = 1.0, 2.0

    output1 = jax.random.normal(k1, (B, D), dtype=jnp.float32)
    output2 = jax.random.normal(k2, (B, D), dtype=jnp.float32)
    label = jax.random.bernoulli(k3, 0.5, (B,)).astype(jnp.float32)

    loss, dist = contrastive_loss(output1, output2, label,
                                  margin_pos=margin_pos,
                                  margin_neg=margin_neg)
    loss = jax.block_until_ready(loss)
    dist = jax.block_until_ready(dist)

    ref_loss, ref_dist = _reference(output1, output2, label, margin_neg)
    assert jnp.allclose(loss, ref_loss, atol=1e-5, rtol=1e-5)
    assert jnp.allclose(dist, ref_dist, atol=1e-5, rtol=1e-5)

    print("KERNEL_OK")
</pallas_src>

<mosaic_0001>
module attributes {stable_mosaic.version = 11 : i64} {
  func.func @_dist_kernel(%arg0: i32, %arg1: memref<16x32xf32, #tpu.memory_space<vmem>>, %arg2: memref<16x32xf32, #tpu.memory_space<vmem>>, %arg3: memref<16x1xf32, #tpu.memory_space<vmem>>) attributes {dimension_semantics = [#tpu.dimension_semantics<parallel>], iteration_bounds = array<i64: 2>, scalar_prefetch = 0 : i64, scratch_operands = 0 : i64, tpu.core_type = #tpu.core_type<tc>, window_params = [{transform_indices = @transform_0, window_bounds = array<i64: 16, 32>}, {transform_indices = @transform_1, window_bounds = array<i64: 16, 32>}, {transform_indices = @transform_2, window_bounds = array<i64: 16, 1>}]} {
    %cst = arith.constant 0.000000e+00 : f32
    %0 = vector.broadcast %cst : f32 to vector<16x1xf32>
    %c0 = arith.constant 0 : index
    %c0_0 = arith.constant 0 : index
    %1 = vector.load %arg1[%c0, %c0_0] : memref<16x32xf32, #tpu.memory_space<vmem>>, vector<16x32xf32>
    %c0_1 = arith.constant 0 : index
    %c0_2 = arith.constant 0 : index
    %2 = vector.load %arg2[%c0_1, %c0_2] : memref<16x32xf32, #tpu.memory_space<vmem>>, vector<16x32xf32>
    %3 = arith.subf %1, %2 : vector<16x32xf32>
    %cst_3 = arith.constant 9.99999997E-7 : f32
    %4 = vector.broadcast %cst_3 : f32 to vector<16x32xf32>
    %5 = arith.addf %3, %4 : vector<16x32xf32>
    %6 = arith.mulf %5, %5 : vector<16x32xf32>
    %cst_4 = arith.constant dense<0.000000e+00> : vector<16xf32>
    %7 = vector.multi_reduction <add>, %6, %cst_4 [1] : vector<16x32xf32> to vector<16xf32>
    %8 = vector.shape_cast %7 : vector<16xf32> to vector<16x1xf32>
    %9 = arith.addf %0, %8 : vector<16x1xf32>
    %10 = math.sqrt %9 : vector<16x1xf32>
    %c0_5 = arith.constant 0 : index
    %c0_6 = arith.constant 0 : index
    %11 = vector.load %arg3[%c0_5, %c0_6] : memref<16x1xf32, #tpu.memory_space<vmem>>, vector<16x1xf32>
    tpu.vector_store %arg3[%c0_5, %c0_6], %10 {strides = array<i32>} : memref<16x1xf32, #tpu.memory_space<vmem>>, vector<16x1xf32>,
    return
  }
  func.func @transform_0(%arg0: i32) -> (i32, i32) {
    %c0_i32 = arith.constant 0 : i32
    %c0_i32_0 = arith.constant 0 : i32
    return %arg0, %c0_i32 : i32, i32
  }
  func.func @transform_1(%arg0: i32) -> (i32, i32) {
    %c0_i32 = arith.constant 0 : i32
    %c0_i32_0 = arith.constant 0 : i32
    return %arg0, %c0_i32 : i32, i32
  }
  func.func @transform_2(%arg0: i32) -> (i32, i32) {
    %c0_i32 = arith.constant 0 : i32
    %c0_i32_0 = arith.constant 0 : i32
    return %arg0, %c0_i32 : i32, i32
  }
}

</mosaic_0001>

<llo_original>
// kernel: tpu_custom_call.1
$region0: #{tpu_custom_call.1}
  #allocation0 [shape = 'u32[]', space=smem, size = 0x4, offset = 0x4, fixed_abs, tag = 'smem constant byte address 0x4 - core index']
  #allocation1 [shape = 'u32[144,128]{1,0:T(1,128)}', space=vmem, size = 0x12000, scoped, tag = 'internal scratch']
  %s0 = inlined_call_operand.hbm [shape: f32[24,32], index: 0, kind: input, shape index: {}]
  %s1 = inlined_call_operand.hbm [shape: f32[24,32], index: 1, kind: input, shape index: {}]
  %s2 = inlined_call_operand.vmem [shape: f32[24,1], index: 2, kind: output, shape index: {}]
  %s3 = sld [smem:[#allocation0]]
  $region97: #{tpu_custom_call.1} parent=0
    _
  %s5 = ssub.s32 1, %s3
  %s6 = scalar_select 0, %s5, %s3
  $region1: #{tpu_custom_call.1} parent=0
    #allocation2 [shape = 'u8[16384]{0}', space=vmem, size = 0x4000, scoped, tag = 'input window, operand 0']
    #allocation3 [shape = 's32[2]{0}', space=sflag, size = 0x8, scoped, tag = 'scoped memory for tpu_custom_call.1']
    #allocation4 [shape = 'u8[16384]{0}', space=vmem, size = 0x4000, scoped, tag = 'input window, operand 1']
    #allocation5 [shape = 's32[2]{0}', space=sflag, size = 0x8, scoped, tag = 'scoped memory for tpu_custom_call.1']
    #allocation6 [shape = 'u8[16384]{0}', space=vmem, size = 0x4000, scoped, tag = 'output window, operand 0']
    %7 = vsyncpa [#allocation3], 0
    %s8 = scalar_lea.sflag [#allocation3], 1
    %9 = vsyncpa %s8, 0
    %10 = vsyncpa [#allocation5], 0
    %s11 = scalar_lea.sflag [#allocation5], 1
    %12 = vsyncpa %s11, 0
    loop: start=0, step=1, limit=4
    $region2: #{tpu_custom_call.1} parent=1 // loop_pre_header
      _
    $region3: #{tpu_custom_call.1} parent=1 // loop_header
      %s14 = sphi 0, %s18
      %p15 = scmp.ge.s32.totalorder %s14, 4
      %s24 = sphi 0, %s26
      %s27 = sphi 0, %s24
      %s28 = sphi 0, %s27
      %s44 = sphi 0, %s28
      %s50 = sphi 0, %s52
      %s53 = sphi 0, %s50
      %s54 = sphi 0, %s53
      %s70 = sphi 0, %s54
      %s76 = sphi 0, %s78
      %s79 = sphi 0, %s76
      %s80 = sphi 0, %s79
      %s96 = sphi 0, %s80
    $region4: #{tpu_custom_call.1} parent=1 // loop_header_branch
      %17 = sbr.rel (%p15) target = $region8
    $region5: #{tpu_custom_call.1} parent=1 // loop_body
      %s19 = ssub.s32 %s14, 1
      %s20 = ssub.s32 %s14, 2
      %s21 = sadd.s32 %s14, 1
      %s22 = ssub.s32 %s14, %s21
      %p23 = scmp.eq.s32.totalorder %s22, 0
      %s25 = sadd.s32 %s24, 1
      %s26 = scalar_select %p23, %s24, %s25
      %p29 = pneg %p23
      %p30 = scmp.eq.s32.totalorder %s14, 1
      %p31 = por %p29, %p30
      %p32 = scmp.ne.s32.totalorder %s24, %s27
      %p33 = scmp.eq.s32.totalorder %s14, 0
      %p34 = por %p32, %p33
      %p35 = scmp.ne.s32.totalorder %s24, %s27
      %p36 = scmp.eq.s32.totalorder %s19, 1
      %p37 = por %p35, %p36
      %p38 = scmp.ne.s32.totalorder %s27, %s28
      %p39 = scmp.eq.s32.totalorder %s19, 0
      %p40 = por %p38, %p39
      %p41 = scmp.ne.s32.totalorder %s27, %s28
      %p42 = scmp.eq.s32.totalorder %s20, 1
      %p43 = por %p41, %p42
      %p45 = scmp.ne.s32.totalorder %s28, %s44
      %p46 = scmp.eq.s32.totalorder %s20, 0
      %p47 = por %p45, %p46
      %s48 = ssub.s32 %s14, %s21
      %p49 = scmp.eq.s32.totalorder %s48, 0
      %s51 = sadd.s32 %s50, 1
      %s52 = scalar_select %p49, %s50, %s51
      %p55 = pneg %p49
      %p56 = scmp.eq.s32.totalorder %s14, 1
      %p57 = por %p55, %p56
      %p58 = scmp.ne.s32.totalorder %s50, %s53
      %p59 = scmp.eq.s32.totalorder %s14, 0
      %p60 = por %p58, %p59
      %p61 = scmp.ne.s32.totalorder %s50, %s53
      %p62 = scmp.eq.s32.totalorder %s19, 1
      %p63 = por %p61, %p62
      %p64 = scmp.ne.s32.totalorder %s53, %s54
      %p65 = scmp.eq.s32.totalorder %s19, 0
      %p66 = por %p64, %p65
      %p67 = scmp.ne.s32.totalorder %s53, %s54
      %p68 = scmp.eq.s32.totalorder %s20, 1
      %p69 = por %p67, %p68
      %p71 = scmp.ne.s32.totalorder %s54, %s70
      %p72 = scmp.eq.s32.totalorder %s20, 0
      %p73 = por %p71, %p72
      %s74 = ssub.s32 %s14, %s21
      %p75 = scmp.eq.s32.totalorder %s74, 0
      %s77 = sadd.s32 %s76, 1
      %s78 = scalar_select %p75, %s76, %s77
      %p81 = pneg %p75
      %p82 = scmp.eq.s32.totalorder %s14, 1
      %p83 = por %p81, %p82
      %p84 = scmp.ne.s32.totalorder %s76, %s79
      %p85 = scmp.eq.s32.totalorder %s14, 0
      %p86 = por %p84, %p85
      %p87 = scmp.ne.s32.totalorder %s76, %s79
      %p88 = scmp.eq.s32.totalorder %s19, 1
      %p89 = por %p87, %p88
      %p90 = scmp.ne.s32.totalorder %s79, %s80
      %p91 = scmp.eq.s32.totalorder %s19, 0
      %p92 = por %p90, %p91
      %p93 = scmp.ne.s32.totalorder %s79, %s80
      %p94 = scmp.eq.s32.totalorder %s20, 1
      %p95 = por %p93, %p94
      %p97 = scmp.ne.s32.totalorder %s80, %s96
      %p98 = scmp.eq.s32.totalorder %s20, 0
      %p99 = por %p97, %p98
      %p100 = scmp.le.s32.totalorder 1, %s14
      %p101 = scmp.lt.s32.totalorder %s14, 3
      %p102 = pnand %p100, %p101
      %p103 = pneg %p102
      // Predicated region
      $region9: #{tpu_custom_call.1} parent=5 // pred_check
        _
      $region10: #{tpu_custom_call.1} parent=5 // pred_check_branch
        %105 = sbr.rel (%p102) target = $region12
      $region11: #{tpu_custom_call.1} parent=5 // pred_region
        %s106 = ssub.s32 %s14, 1
      $region12: #{tpu_custom_call.1} parent=5 // pred_fallthru
        _
      %p107 = scmp.lt.s32.totalorder %s14, 2
      // Predicated region
      $region13: #{tpu_custom_call.1} parent=5 // pred_check
        %p108 = pneg %p107
      $region14: #{tpu_custom_call.1} parent=5 // pred_check_branch
        %110 = sbr.rel (%p108) target = $region16
      $region15: #{tpu_custom_call.1} parent=5 // pred_region
        // Predicated region
        $region17: #{tpu_custom_call.1} parent=15 // pred_check
          %p111 = pneg %p34
        $region18: #{tpu_custom_call.1} parent=15 // pred_check_branch
          %113 = sbr.rel (%p111) target = $region20
        $region19: #{tpu_custom_call.1} parent=15 // pred_region
          %s114 = sand.u32 %s24, 1
          %s115 = scalar_lea.sflag [#allocation3], %s114
          %s116 = sand.u32 %s24, 1
          %s117 = smul.addr %s116, 16
          %s118 = scalar_lea.vmem [#allocation2], %s117
          %s119 = smul.u32 2, %s14
          %s120 = ssub.s32 3, %s119
          %p121 = scmp.lt.s32.totalorder %s120, 2
          %s122 = scalar_select %p121, %s120, 2
          %s123 = smul.u32 128, %s122
          %s125 = ssub.s32 256, %s123
          %126 = vsyncadd %s115, %s125
          %p127 = scmp.ne.s32.totalorder 0, %s123
          %s128 = smul.addr %s119, 128
          %s129 = scalar_lea.hbm %s0, %s128
          %s130 = smul.u32 8, %s122
          %s131 = sshll.u32 %s118, 4
          %s132 = int_to_ptr.vmem [resolvable:$true] %s131
          %s133 = sshll.u32 %s130, 4
          %137 = dma.hbm_to_vmem [thread:$0]  (%p127), %s129, %s133, %s132, %s115, 128, 128, 8
        $region20: #{tpu_custom_call.1} parent=15 // pred_fallthru
          _
        // Predicated region
        $region21: #{tpu_custom_call.1} parent=15 // pred_check
          %p138 = pneg %p60
        $region22: #{tpu_custom_call.1} parent=15 // pred_check_branch
          %140 = sbr.rel (%p138) target = $region24
        $region23: #{tpu_custom_call.1} parent=15 // pred_region
          %s141 = sand.u32 %s50, 1
          %s142 = scalar_lea.sflag [#allocation5], %s141
          %s143 = sand.u32 %s50, 1
          %s144 = smul.addr %s143, 16
          %s145 = scalar_lea.vmem [#allocation4], %s144
          %s146 = smul.u32 2, %s14
          %s147 = ssub.s32 3, %s146
          %p148 = scmp.lt.s32.totalorder %s147, 2
          %s149 = scalar_select %p148, %s147, 2
          %s150 = smul.u32 128, %s149
          %s152 = ssub.s32 256, %s150
          %153 = vsyncadd %s142, %s152
          %p154 = scmp.ne.s32.totalorder 0, %s150
          %s155 = smul.addr %s146, 128
          %s156 = scalar_lea.hbm %s1, %s155
          %s157 = smul.u32 8, %s149
          %s158 = sshll.u32 %s145, 4
          %s159 = int_to_ptr.vmem [resolvable:$true] %s158
          %s160 = sshll.u32 %s157, 4
          %164 = dma.hbm_to_vmem [thread:$0]  (%p154), %s156, %s160, %s159, %s142, 128, 128, 8
        $region24: #{tpu_custom_call.1} parent=15 // pred_fallthru
          _
      $region16: #{tpu_custom_call.1} parent=5 // pred_fallthru
        _
      %p165 = scmp.le.s32.totalorder 1, %s14
      %p166 = scmp.lt.s32.totalorder %s14, 3
      %p167 = pnand %p165, %p166
      %p168 = pneg %p167
      // Predicated region
      $region25: #{tpu_custom_call.1} parent=5 // pred_check
        _
      $region26: #{tpu_custom_call.1} parent=5 // pred_check_branch
        %170 = sbr.rel (%p167) target = $region28
      $region27: #{tpu_custom_call.1} parent=5 // pred_region
        %s171 = ssub.s32 %s14, 1
        %s172 = sand.u32 %s27, 1
        %s173 = scalar_lea.sflag [#allocation3], %s172
        %s174 = sand.u32 %s27, 1
        %s175 = smul.addr %s174, 16
        %s176 = scalar_lea.vmem [#allocation2], %s175
        // Predicated region
        $region29: #{tpu_custom_call.1} parent=27 // pred_check
          %p177 = pneg %p40
        $region30: #{tpu_custom_call.1} parent=27 // pred_check_branch
          %179 = sbr.rel (%p177) target = $region32
        $region31: #{tpu_custom_call.1} parent=27 // pred_region
          %180 = dma.done %s173, 256
        $region32: #{tpu_custom_call.1} parent=27 // pred_fallthru
          _
        %s181 = sand.u32 %s53, 1
        %s182 = scalar_lea.sflag [#allocation5], %s181
        %s183 = sand.u32 %s53, 1
        %s184 = smul.addr %s183, 16
        %s185 = scalar_lea.vmem [#allocation4], %s184
        // Predicated region
        $region33: #{tpu_custom_call.1} parent=27 // pred_check
          %p186 = pneg %p66
        $region34: #{tpu_custom_call.1} parent=27 // pred_check_branch
          %188 = sbr.rel (%p186) target = $region36
        $region35: #{tpu_custom_call.1} parent=27 // pred_region
          %189 = dma.done %s182, 256
        $region36: #{tpu_custom_call.1} parent=27 // pred_fallthru
          _
        %s190 = sand.u32 %s27, 1
        %s191 = scalar_lea.sflag [#allocation3], %s190
        %s192 = sand.u32 %s27, 1
        %s193 = smul.addr %s192, 16
        %s194 = scalar_lea.vmem [#allocation2], %s193
        %p195 = pneg %p40
        %p196 = pneg %p37
        %s197 = sand.u32 %s53, 1
        %s198 = scalar_lea.sflag [#allocation5], %s197
        %s199 = sand.u32 %s53, 1
        %s200 = smul.addr %s199, 16
        %s201 = scalar_lea.vmem [#allocation4], %s200
        %p202 = pneg %p66
        %p203 = pneg %p63
        %p204 = pneg %p92
        %p205 = pneg %p89
        %s206 = sand.u32 %s79, 1
        %s207 = sand.u32 %s79, 1
        %s208 = smul.addr %s207, 16
        %s209 = scalar_lea.vmem [#allocation6], %s208
        %s210 = smul.u32 2, %s19
        %s211 = ssub.s32 3, %s210
        %p212 = scmp.lt.s32.totalorder %s211, 2
        %s213 = scalar_select %p212, %s211, 2
        %s214 = smul.u32 128, %s213
        %s215 = smul.u32 2, %s19
        %s216 = ssub.s32 3, %s215
        %p217 = scmp.lt.s32.totalorder %s216, 2
        %s218 = scalar_select %p217, %s216, 2
        %s219 = smul.u32 128, %s218
        %s220 = smul.u32 2, %s19
        %s221 = ssub.s32 3, %s220
        %p222 = scmp.lt.s32.totalorder %s221, 2
        %s223 = scalar_select %p222, %s221, 2
        %s224 = smul.u32 128, %s223
        %v225 = vld [vmem:[%s176] sm:$0xff]
        %v226 = vld [vmem:[%s176 + $0x8] sm:$0xff]
        %v227 = vld [vmem:[%s185] sm:$0xff]
        %v228 = vld [vmem:[%s185 + $0x8] sm:$0xff]
        %v229 = vsub.f32 %v225, %v227
        %v230 = vsub.f32 %v226, %v228
        %v231 = vadd.f32 %v229, 1e-06
        %v232 = vadd.f32 %v230, 1e-06
        %v233 = vmul.f32 %v231, %v231
        %v234 = vmul.f32 %v232, %v232
        %vm235 = vcmask 261120
        %v236 = vsel %vm235, %v233, 0.0
        %237 = vadd.xlane.f32.xlu0 %v236
        %v238 = vpop.xlane.xlu0 %237
        %v239 = vsel %vm235, %v234, 0.0
        %240 = vadd.xlane.f32.xlu0 %v239
        %v241 = vpop.xlane.xlu0 %240
        %v242 = vadd.f32 %v238, 0.0
        %v243 = vadd.f32 %v241, 0.0
        %v244 = vrsqrt.pop %v242
        %v245 = vmul.f32 %v242, %v244
        %vm246 = vcmp.eq.f32.partialorder %v242, inf
        %v247 = vsel %vm246, %v242, %v245
        %vm248 = vcmp.eq.f32.partialorder %v242, 0.0
        %v249 = vand.u32 %v242, 2147483648
        %v250 = vsel %vm248, %v249, %v247
        %v251 = vrsqrt.pop %v243
        %v252 = vmul.f32 %v243, %v251
        %vm253 = vcmp.eq.f32.partialorder %v243, inf
        %v254 = vsel %vm253, %v243, %v252
        %vm255 = vcmp.eq.f32.partialorder %v243, 0.0
        %v256 = vand.u32 %v243, 2147483648
        %v257 = vsel %vm255, %v256, %v254
        %vm258 = vcmask 7168
        %259 = vst.msk [vmem:[%s209] sm:$0xff] %vm258, %v250
        %260 = vst.msk [vmem:[%s209 + $0x8] sm:$0xff] %vm258, %v257
        %s261 = sand.u32 %s79, 1
        %s262 = sand.u32 %s79, 1
        %s263 = smul.addr %s262, 16
        %s264 = scalar_lea.vmem [#allocation6], %s263
        // Predicated region
        $region37: #{tpu_custom_call.1} parent=27 // pred_check
          %p265 = pneg %p89
        $region38: #{tpu_custom_call.1} parent=27 // pred_check_branch
          %267 = sbr.rel (%p265) target = $region40
        $region39: #{tpu_custom_call.1} parent=27 // pred_region
          %s268 = smul.u32 2, %s19
          %s269 = ssub.s32 3, %s268
          %p270 = scmp.lt.s32.totalorder %s269, 2
          %s271 = scalar_select %p270, %s269, 2
          %s272 = smul.u32 128, %s271
          %p273 = scmp.ne.s32.totalorder 0, %s272
          %s274 = smul.addr %s268, 8
          %s275 = scalar_lea.vmem %s2, %s274
          // Predicated region
          $region41: #{tpu_custom_call.1} parent=39 // pred_check
            %p276 = pneg %p273
          $region42: #{tpu_custom_call.1} parent=39 // pred_check_branch
            %278 = sbr.rel (%p276) target = $region44
          $region43: #{tpu_custom_call.1} parent=39 // pred_region
            // Predicated region
            $region45: #{tpu_custom_call.1} parent=43 // pred_check
              _
            $region46: #{tpu_custom_call.1} parent=43 // pred_check_branch
              %280 = sbr.rel (0) target = $region48
            $region47: #{tpu_custom_call.1} parent=43 // pred_region
              // Predicated region
              $region67: #{tpu_custom_call.1} parent=47 // pred_check
                _
              $region68: #{tpu_custom_call.1} parent=47 // pred_check_branch
                %332 = sbr.rel (0) target = $region70
              $region69: #{tpu_custom_call.1} parent=47 // pred_region
                %s333 = sshrl.u32 %s271, 1
                // While loop
                $region71: #{tpu_custom_call.1} parent=69 // loop_pre_header
                  _
                $region72: #{tpu_custom_call.1} parent=69 // loop_header
                  %s335 = sphi 0, %s337
                  %p336 = scmp.ge.s32.totalorder %s335, %s333
                  %s340 = sphi 0, %s349
                  %s341 = sphi %s264, %s352
                  %s342 = sphi %s275, %s353
                $region73: #{tpu_custom_call.1} parent=69 // loop_header_branch
                  %339 = sbr.rel (%p336) target = $region77
                $region74: #{tpu_custom_call.1} parent=69 // loop_body
                  %v343 = vld [vmem:[%s341] sm:$0xff]
                  %344 = vst [vmem:[%s342] sm:$0xff] %v343
                  %v345 = vld [vmem:[%s341 + $0x8] sm:$0xff]
                  %346 = vst [vmem:[%s342 + $0x8] sm:$0xff] %v345
                  %s347 = sadd.s32 1, %s340
                  %p348 = scmp.ge.s32.totalorder %s347, %s333
                  %s349 = scalar_select %p348, 0, %s347
                  %s350 = smul.u32 %s349, 16
                  %s351 = smul.u32 %s349, 16
                  %s352 = scalar_lea.vmem %s264, %s350 [#allocation6]
                  %s353 = scalar_lea.vmem %s275, %s351
                $region75: #{tpu_custom_call.1} parent=69 // loop_footer
                  %s337 = sadd.s32 %s335, 1
                $region76: #{tpu_custom_call.1} parent=69 // loop_footer_branch
                  %334 = sbr.rel target = $region72
                $region77: #{tpu_custom_call.1} parent=69 // loop_exit
                  _
                %s354 = sshrl.u32 %s271, 1
                %s355 = sand.u32 %s271, 1
                %s356 = smul.u32 %s354, 2
                %s357 = smul.u32 8, %s356
                %s358 = scalar_lea.vmem %s264, %s357 [#allocation6]
                %s359 = smul.u32 8, %s356
                %s360 = scalar_lea.vmem %s275, %s359
                // While loop
                $region78: #{tpu_custom_call.1} parent=69 // loop_pre_header
                  _
                $region79: #{tpu_custom_call.1} parent=69 // loop_header
                  %s362 = sphi 0, %s364
                  %p363 = scmp.ge.s32.totalorder %s362, %s355
                  %s367 = sphi 0, %s374
                  %s368 = sphi %s358, %s377
                  %s369 = sphi %s360, %s378
                $region80: #{tpu_custom_call.1} parent=69 // loop_header_branch
                  %366 = sbr.rel (%p363) target = $region84
                $region81: #{tpu_custom_call.1} parent=69 // loop_body
                  %v370 = vld [vmem:[%s368] sm:$0xff]
                  %371 = vst [vmem:[%s369] sm:$0xff] %v370
                  %s372 = sadd.s32 1, %s367
                  %p373 = scmp.ge.s32.totalorder %s372, %s355
                  %s374 = scalar_select %p373, 0, %s372
                  %s375 = smul.u32 %s374, 8
                  %s376 = smul.u32 %s374, 8
                  %s377 = scalar_lea.vmem %s358, %s375 [#allocation6]
                  %s378 = scalar_lea.vmem %s360, %s376
                $region82: #{tpu_custom_call.1} parent=69 // loop_footer
                  %s364 = sadd.s32 %s362, 1
                $region83: #{tpu_custom_call.1} parent=69 // loop_footer_branch
                  %361 = sbr.rel target = $region79
                $region84: #{tpu_custom_call.1} parent=69 // loop_exit
                  _
              $region70: #{tpu_custom_call.1} parent=47 // pred_fallthru
                _
              // Predicated region
              $region85: #{tpu_custom_call.1} parent=47 // pred_check
                _
              $region86: #{tpu_custom_call.1} parent=47 // pred_check_branch
                %380 = sbr.rel target = $region88
              $region87: #{tpu_custom_call.1} parent=47 // pred_region
                _
              $region88: #{tpu_custom_call.1} parent=47 // pred_fallthru
                _
            $region48: #{tpu_custom_call.1} parent=43 // pred_fallthru
              _
            // Predicated region
            $region49: #{tpu_custom_call.1} parent=43 // pred_check
              _
            $region50: #{tpu_custom_call.1} parent=43 // pred_check_branch
              %282 = sbr.rel target = $region52
            $region51: #{tpu_custom_call.1} parent=43 // pred_region
              %s284 = ssub.s32 256, 1
              %s285 = sshrl.u32 %s271, 1
              // While loop
              $region53: #{tpu_custom_call.1} parent=51 // loop_pre_header
                _
              $region54: #{tpu_custom_call.1} parent=51 // loop_header
                %s287 = sphi 0, %s289
                %p288 = scmp.ge.s32.totalorder %s287, %s285
                %s292 = sphi 0, %s301
                %s293 = sphi %s264, %s304
                %s294 = sphi %s275, %s305
              $region55: #{tpu_custom_call.1} parent=51 // loop_header_branch
                %291 = sbr.rel (%p288) target = $region59
              $region56: #{tpu_custom_call.1} parent=51 // loop_body
                %v295 = vld [vmem:[%s293] sm:%s284]
                %296 = vst [vmem:[%s294] sm:%s284] %v295
                %v297 = vld [vmem:[%s293 + $0x8] sm:%s284]
                %298 = vst [vmem:[%s294 + $0x8] sm:%s284] %v297
                %s299 = sadd.s32 1, %s292
                %p300 = scmp.ge.s32.totalorder %s299, %s285
                %s301 = scalar_select %p300, 0, %s299
                %s302 = smul.u32 %s301, 16
                %s303 = smul.u32 %s301, 16
                %s304 = scalar_lea.vmem %s264, %s302 [#allocation6]
                %s305 = scalar_lea.vmem %s275, %s303
              $region57: #{tpu_custom_call.1} parent=51 // loop_footer
                %s289 = sadd.s32 %s287, 1
              $region58: #{tpu_custom_call.1} parent=51 // loop_footer_branch
                %286 = sbr.rel target = $region54
              $region59: #{tpu_custom_call.1} parent=51 // loop_exit
                _
              %s306 = sshrl.u32 %s271, 1
              %s307 = sand.u32 %s271, 1
              %s308 = smul.u32 %s306, 2
              %s309 = smul.u32 8, %s308
              %s310 = scalar_lea.vmem %s264, %s309 [#allocation6]
              %s311 = smul.u32 8, %s308
              %s312 = scalar_lea.vmem %s275, %s311
              // While loop
              $region60: #{tpu_custom_call.1} parent=51 // loop_pre_header
                _
              $region61: #{tpu_custom_call.1} parent=51 // loop_header
                %s314 = sphi 0, %s316
                %p315 = scmp.ge.s32.totalorder %s314, %s307
                %s319 = sphi 0, %s326
                %s320 = sphi %s310, %s329
                %s321 = sphi %s312, %s330
              $region62: #{tpu_custom_call.1} parent=51 // loop_header_branch
                %318 = sbr.rel (%p315) target = $region66
              $region63: #{tpu_custom_call.1} parent=51 // loop_body
                %v322 = vld [vmem:[%s320] sm:%s284]
                %323 = vst [vmem:[%s321] sm:%s284] %v322
                %s324 = sadd.s32 1, %s319
                %p325 = scmp.ge.s32.totalorder %s324, %s307
                %s326 = scalar_select %p325, 0, %s324
                %s327 = smul.u32 %s326, 8
                %s328 = smul.u32 %s326, 8
                %s329 = scalar_lea.vmem %s310, %s327 [#allocation6]
                %s330 = scalar_lea.vmem %s312, %s328
              $region64: #{tpu_custom_call.1} parent=51 // loop_footer
                %s316 = sadd.s32 %s314, 1
              $region65: #{tpu_custom_call.1} parent=51 // loop_footer_branch
                %313 = sbr.rel target = $region61
              $region66: #{tpu_custom_call.1} parent=51 // loop_exit
                _
            $region52: #{tpu_custom_call.1} parent=43 // pred_fallthru
              _
          $region44: #{tpu_custom_call.1} parent=39 // pred_fallthru
            _
          %381 = vnop
        $region40: #{tpu_custom_call.1} parent=27 // pred_fallthru
          _
      $region28: #{tpu_custom_call.1} parent=5 // pred_fallthru
        _
      %p382 = scmp.le.s32.totalorder 2, %s14
      // Predicated region
      $region89: #{tpu_custom_call.1} parent=5 // pred_check
        %p383 = pneg %p382
      $region90: #{tpu_custom_call.1} parent=5 // pred_check_branch
        %385 = sbr.rel (%p383) target = $region92
      $region91: #{tpu_custom_call.1} parent=5 // pred_region
        %s386 = ssub.s32 %s14, 2
        // Predicated region
        $region93: #{tpu_custom_call.1} parent=91 // pred_check
          %p387 = pneg %p95
        $region94: #{tpu_custom_call.1} parent=91 // pred_check_branch
          %389 = sbr.rel (%p387) target = $region96
        $region95: #{tpu_custom_call.1} parent=91 // pred_region
          %s390 = sand.u32 %s80, 1
          %s391 = sand.u32 %s80, 1
          %s392 = smul.addr %s391, 16
          %s393 = scalar_lea.vmem [#allocation6], %s392
        $region96: #{tpu_custom_call.1} parent=91 // pred_fallthru
          _
      $region92: #{tpu_custom_call.1} parent=5 // pred_fallthru
        _
    $region6: #{tpu_custom_call.1} parent=1 // loop_footer
      %s18 = sadd.s32 1, %s14
    $region7: #{tpu_custom_call.1} parent=1 // loop_footer_branch
      %13 = sbr.rel target = $region3
    $region8: #{tpu_custom_call.1} parent=1 // loop_exit
      _
    %394 = vsyncpa [#allocation3], 1
    %s395 = scalar_lea.sflag [#allocation3], 1
    %396 = vsyncpa %s395, 1
    %397 = vsyncpa [#allocation5], 1
    %s398 = scalar_lea.sflag [#allocation5], 1
    %399 = vsyncpa %s398, 1

</llo_original>
